<compile_context>
chip_gen: v5e
topology: v5e:2x2
jax: 0.10.0
libtpu: 0.0.40
codegen_flags: <defaults>
</compile_context>

<pallas_src>
import jax
import jax.numpy as jnp
import numpy as np
from jax.experimental import pallas as pl
from jax.experimental.pallas import tpu as pltpu


# ----------------------------------------------------------------------------- #
# DCT helpers (match torch_dct with norm=None):
#   dct(x)[k] = 2 * sum_n x[n] * cos(pi*(2n+1)*k/(2N))   (unnormalized DCT-II, x2)
#   idct       = exact inverse of the above
# ----------------------------------------------------------------------------- #
def make_dct_matrices(n):
    k = np.arange(n)[:, None]          # (N, 1)
    m = np.arange(n)[None, :]          # (1, N)
    D = 2.0 * np.cos(np.pi * (2.0 * m + 1.0) * k / (2.0 * n))   # column form: X = D @ x
    Dinv = np.linalg.inv(D)                                      # column form: x = Dinv @ X
    return jnp.asarray(D, jnp.float32), jnp.asarray(Dinv, jnp.float32)


def _round_up(x, m):
    return ((x + m - 1) // m) * m


def _choose_lane_tile(R, max_tile=8192, min_split=256):
    """Pick (lane_tile, num_grid_steps) for R frames on the lane axis.

    * R < min_split: one block whose last dim equals the full array dim
      (legal for any R, no 128-divisibility requirement).
    * Otherwise: a 128-multiple tile capped at max_tile, sized so the grid has
      at least 2 steps (keeps both v7x TensorCores busy under "parallel").
    * R is never padded; the last block may be partial (garbage lanes are
      per-lane-contained and masked on store).
    """
    if R < min_split:
        return R, 1
    lane_tile = min(max_tile, _round_up(pl.cdiv(R, 2), 128))
    return lane_tile, pl.cdiv(R, lane_tile)


# ----------------------------------------------------------------------------- #
# Pallas kernel: per lane tile of frames, for both p and q slabs:
#   (fused pad+idct matmul) -> stable logaddexp with noise -> (fused dct+narrow matmul)
# ----------------------------------------------------------------------------- #
def spectral_attack_kernel(xp_ref, xq_ref, a1_ref, a2_ref, nz_ref, op_ref, oq_ref):
    # xp/xq: (M, T)  a1: (SD, M)  a2: (M, SD)  nz: (SD, 1)  op/oq: (M, T)
    a1 = a1_ref[...]
    a2 = a2_ref[...]
    nz = nz_ref[...]                                   # noise_root == log(noise)

    def attack(x):
        y = jnp.dot(a1, x, preferred_element_type=jnp.float32)        # (SD, T) idct of padded means
        # log(exp(y) + exp(noise_root)) computed stably: max + log(1 + exp(-|d|)).
        # 2 transcendentals/element (EUP), no overflow for large y.
        m = jnp.maximum(y, nz)
        att = m + jnp.log(1.0 + jnp.exp(-jnp.abs(y - nz)))
        return jnp.dot(a2, att, preferred_element_type=jnp.float32)   # (M, T) dct, narrowed

    op_ref[...] = attack(xp_ref[...])
    oq_ref[...] = attack(xq_ref[...])


def spectral_attack_pq(xp, xq, a1, a2, noise_root_col, *, max_lane_tile=8192):
    """xp, xq: (M, R) f32 with frames on the last (lane) axis.  Returns attacked (M, R) pair."""
    M, R = xp.shape
    SD = a1.shape[0]
    lane_tile, steps = _choose_lane_tile(R, max_lane_tile)

    cost = pl.CostEstimate(
        flops=8 * SD * M * R + 8 * SD * R,             # 2 slabs x (2 matmuls + elementwise)
        transcendentals=4 * SD * R,                    # 2 slabs x (exp + log) per spectral element
        bytes_accessed=4 * (4 * M * R + 2 * SD * M + SD),
    )

    frame_spec = pl.BlockSpec((M, lane_tile), lambda i: (0, i))        # lane-dense frame tile
    a1_spec = pl.BlockSpec((SD, M), lambda i: (0, 0))                  # resident constants
    a2_spec = pl.BlockSpec((M, SD), lambda i: (0, 0))
    nz_spec = pl.BlockSpec((SD, 1), lambda i: (0, 0))

    return pl.pallas_call(
        spectral_attack_kernel,
        out_shape=(jax.ShapeDtypeStruct((M, R), jnp.float32),
                   jax.ShapeDtypeStruct((M, R), jnp.float32)),
        grid_spec=pltpu.PrefetchScalarGridSpec(
            num_scalar_prefetch=0,
            grid=(steps,),
            in_specs=[frame_spec, frame_spec, a1_spec, a2_spec, nz_spec],
            out_specs=[frame_spec, frame_spec],
        ),
        compiler_params=pltpu.CompilerParams(
            dimension_semantics=("parallel",)),        # frame tiles independent -> megacore shard
        cost_estimate=cost,
    )(xp, xq, a1, a2, noise_root_col)


# ----------------------------------------------------------------------------- #
# Module-equivalent wrapper
# ----------------------------------------------------------------------------- #
class SpectralAttackInit:
    def __init__(self, spectral_dim, mfcc_dim, init_root):
        self.spectral_dim = spectral_dim
        self.mfcc_dim = mfcc_dim
        self.noise_root = jnp.asarray(init_root, jnp.float32)          # (spectral_dim,)
        self.D, self.Dinv = make_dct_matrices(spectral_dim)
        # Fold zero-padding into the idct operand and output-narrowing into the dct operand:
        #   row form:  log_spec = pad(x) @ Dinv.T  ==  x @ (Dinv[:, :M]).T
        #   row form:  out[:, :M] = z @ (D[:M, :]).T
        # transposed (frames-on-lanes) operands:
        self.a1 = self.Dinv[:, :mfcc_dim]                              # (SD, M)
        self.a2 = self.D[:mfcc_dim, :]                                 # (M, SD)
        self.noise_root_col = self.noise_root.reshape(spectral_dim, 1)

    def get_noise(self):
        return jnp.exp(self.noise_root)

    def forward(self, p_means, p_covariances, q_means, q_covariances, num_phones_mask):
        S, F, M = p_means.shape
        # One transpose materialization per array (frames -> lane axis); no concat/pad/slice.
        xp = p_means.astype(jnp.float32).reshape(S * F, M).T           # (M, S*F)
        xq = q_means.astype(jnp.float32).reshape(S * F, M).T           # (M, S*F)
        op_t, oq_t = spectral_attack_pq(xp, xq, self.a1, self.a2, self.noise_root_col)
        p_att = op_t.T.reshape(S, F, M)
        q_att = oq_t.T.reshape(S, F, M)
        # TODO(synk): trained_model(p_att, p_cov, q_att, q_cov, mask) needs an external checkpoint.
        return p_att, q_att


# ----------------------------------------------------------------------------- #
# Pure-JAX reference (mirrors the PyTorch pad/idct/exp/+noise/log/dct/narrow path)
# ----------------------------------------------------------------------------- #
def reference_attack(means, noise_root, spectral_dim, D, Dinv):
    S, F, M = means.shape
    pad = jnp.zeros((S, F, spectral_dim - M), jnp.float32)
    padded = jnp.concatenate([means.astype(jnp.float32), pad], axis=2)
    log_spec = padded @ Dinv.T                                         # idct along last dim
    attacked = jnp.log(jnp.exp(log_spec) + jnp.exp(noise_root))
    out = attacked @ D.T                                               # dct along last dim
    return out[:, :, :M]


def _run_case(num_speakers, num_feats, mfcc_dim, spectral_dim, seed):
    key = jax.random.PRNGKey(seed)
    k1, k2, k3, k4, k5 = jax.random.split(key, 5)
    p_means = jax.random.normal(k1, (num_speakers, num_feats, mfcc_dim), jnp.float32) * 0.1
    q_means = jax.random.normal(k2, (num_speakers, num_feats, mfcc_dim), jnp.float32) * 0.1
    p_cov = jax.random.normal(k3, (num_speakers, num_feats, mfcc_dim, mfcc_dim), jnp.float32)
    q_cov = jax.random.normal(k4, (num_speakers, num_feats, mfcc_dim, mfcc_dim), jnp.float32)
    mask = jnp.ones((num_speakers, num_feats), jnp.float32)
    init_root = jax.random.normal(k5, (spectral_dim,), jnp.float32) * 0.1

    model = SpectralAttackInit(spectral_dim, mfcc_dim, init_root)
    p_att, q_att = model.forward(p_means, p_cov, q_means, q_cov, mask)
    jax.block_until_ready((p_att, q_att))

    p_ref = reference_attack(p_means, init_root, spectral_dim, model.D, model.Dinv)
    q_ref = reference_attack(q_means, init_root, spectral_dim, model.D, model.Dinv)
    assert p_att.shape == (num_speakers, num_feats, mfcc_dim)
    assert q_att.shape == (num_speakers, num_feats, mfcc_dim)
    np.testing.assert_allclose(np.asarray(p_att), np.asarray(p_ref), rtol=1e-4, atol=1e-4)
    np.testing.assert_allclose(np.asarray(q_att), np.asarray(q_ref), rtol=1e-4, atol=1e-4)


if __name__ == "__main__":
    # Small case (single full-width block, grid=(1,)).
    _run_case(num_speakers=2, num_feats=8, mfcc_dim=13, spectral_dim=32, seed=0)
    # Slightly larger case exercising the multi-step grid with a partial last block
    # (R = 2*170 = 340 frames -> lane_tile=256, grid=(2,), last block 84 valid lanes).
    _run_case(num_speakers=2, num_feats=170, mfcc_dim=13, spectral_dim=32, seed=0)
    print("KERNEL_OK")
</pallas_src>

<mosaic_0001>
module attributes {stable_mosaic.version = 11 : i64} {
  func.func @spectral_attack_kernel(%arg0: i32, %arg1: memref<13x16xf32, #tpu.memory_space<vmem>>, %arg2: memref<13x16xf32, #tpu.memory_space<vmem>>, %arg3: memref<32x13xf32, #tpu.memory_space<vmem>>, %arg4: memref<13x32xf32, #tpu.memory_space<vmem>>, %arg5: memref<32x1xf32, #tpu.memory_space<vmem>>, %arg6: memref<13x16xf32, #tpu.memory_space<vmem>>, %arg7: memref<13x16xf32, #tpu.memory_space<vmem>>) attributes {dimension_semantics = [#tpu.dimension_semantics<parallel>], iteration_bounds = array<i64: 1>, scalar_prefetch = 0 : i64, scratch_operands = 0 : i64, tpu.core_type = #tpu.core_type<tc>, window_params = [{transform_indices = @transform_0, window_bounds = array<i64: 13, 16>}, {transform_indices = @transform_1, window_bounds = array<i64: 13, 16>}, {pipeline_mode = #tpu.pipeline_mode<synchronous>, transform_indices = @transform_2, window_bounds = array<i64: 32, 13>}, {pipeline_mode = #tpu.pipeline_mode<synchronous>, transform_indices = @transform_3, window_bounds = array<i64: 13, 32>}, {pipeline_mode = #tpu.pipeline_mode<synchronous>, transform_indices = @transform_4, window_bounds = array<i64: 32, 1>}, {transform_indices = @transform_5, window_bounds = array<i64: 13, 16>}, {transform_indices = @transform_6, window_bounds = array<i64: 13, 16>}]} {
    %c0 = arith.constant 0 : index
    %c0_0 = arith.constant 0 : index
    %0 = vector.load %arg3[%c0, %c0_0] : memref<32x13xf32, #tpu.memory_space<vmem>>, vector<32x13xf32>
    %c0_1 = arith.constant 0 : index
    %c0_2 = arith.constant 0 : index
    %1 = vector.load %arg4[%c0_1, %c0_2] : memref<13x32xf32, #tpu.memory_space<vmem>>, vector<13x32xf32>
    %c0_3 = arith.constant 0 : index
    %c0_4 = arith.constant 0 : index
    %2 = vector.load %arg5[%c0_3, %c0_4] : memref<32x1xf32, #tpu.memory_space<vmem>>, vector<32x1xf32>
    %c0_5 = arith.constant 0 : index
    %c0_6 = arith.constant 0 : index
    %3 = vector.load %arg1[%c0_5, %c0_6] : memref<13x16xf32, #tpu.memory_space<vmem>>, vector<13x16xf32>
    %cst = arith.constant dense<0.000000e+00> : vector<32x16xf32>
    %4 = tpu.matmul %0, %3, %cst {dimension_numbers = #tpu.dot_dimension_numbers<[1], [0], [0], [1], [0, 0, 1, 1], [], []>} : vector<32x13xf32>, vector<13x16xf32>, vector<32x16xf32> -> vector<32x16xf32>
    %5 = vector.broadcast %2 : vector<32x1xf32> to vector<32x16xf32>
    %6 = arith.maximumf %4, %5 : vector<32x16xf32>
    %7 = vector.broadcast %2 : vector<32x1xf32> to vector<32x16xf32>
    %8 = arith.subf %4, %7 : vector<32x16xf32>
    %9 = math.absf %8 : vector<32x16xf32>
    %cst_7 = arith.constant 0.000000e+00 : f32
    %10 = vector.broadcast %cst_7 : f32 to vector<32x16xf32>
    %11 = arith.subf %10, %9 : vector<32x16xf32>
    %12 = math.exp %11 : vector<32x16xf32>
    %cst_8 = arith.constant 1.000000e+00 : f32
    %13 = vector.broadcast %cst_8 : f32 to vector<32x16xf32>
    %14 = arith.addf %13, %12 : vector<32x16xf32>
    %15 = math.log %14 : vector<32x16xf32>
    %16 = arith.addf %6, %15 : vector<32x16xf32>
    %cst_9 = arith.constant dense<0.000000e+00> : vector<13x16xf32>
    %17 = tpu.matmul %1, %16, %cst_9 {dimension_numbers = #tpu.dot_dimension_numbers<[1], [0], [0], [1], [0, 0, 1, 1], [], []>} : vector<13x32xf32>, vector<32x16xf32>, vector<13x16xf32> -> vector<13x16xf32>
    %c0_10 = arith.constant 0 : index
    %c0_11 = arith.constant 0 : index
    %18 = vector.load %arg6[%c0_10, %c0_11] : memref<13x16xf32, #tpu.memory_space<vmem>>, vector<13x16xf32>
    tpu.vector_store %arg6[%c0_10, %c0_11], %17 {strides = array<i32>} : memref<13x16xf32, #tpu.memory_space<vmem>>, vector<13x16xf32>,
    %c0_12 = arith.constant 0 : index
    %c0_13 = arith.constant 0 : index
    %19 = vector.load %arg2[%c0_12, %c0_13] : memref<13x16xf32, #tpu.memory_space<vmem>>, vector<13x16xf32>
    %cst_14 = arith.constant dense<0.000000e+00> : vector<32x16xf32>
    %20 = tpu.matmul %0, %19, %cst_14 {dimension_numbers = #tpu.dot_dimension_numbers<[1], [0], [0], [1], [0, 0, 1, 1], [], []>} : vector<32x13xf32>, vector<13x16xf32>, vector<32x16xf32> -> vector<32x16xf32>
    %21 = vector.broadcast %2 : vector<32x1xf32> to vector<32x16xf32>
    %22 = arith.maximumf %20, %21 : vector<32x16xf32>
    %23 = vector.broadcast %2 : vector<32x1xf32> to vector<32x16xf32>
    %24 = arith.subf %20, %23 : vector<32x16xf32>
    %25 = math.absf %24 : vector<32x16xf32>
    %cst_15 = arith.constant 0.000000e+00 : f32
    %26 = vector.broadcast %cst_15 : f32 to vector<32x16xf32>
    %27 = arith.subf %26, %25 : vector<32x16xf32>
    %28 = math.exp %27 : vector<32x16xf32>
    %cst_16 = arith.constant 1.000000e+00 : f32
    %29 = vector.broadcast %cst_16 : f32 to vector<32x16xf32>
    %30 = arith.addf %29, %28 : vector<32x16xf32>
    %31 = math.log %30 : vector<32x16xf32>
    %32 = arith.addf %22, %31 : vector<32x16xf32>
    %cst_17 = arith.constant dense<0.000000e+00> : vector<13x16xf32>
    %33 = tpu.matmul %1, %32, %cst_17 {dimension_numbers = #tpu.dot_dimension_numbers<[1], [0], [0], [1], [0, 0, 1, 1], [], []>} : vector<13x32xf32>, vector<32x16xf32>, vector<13x16xf32> -> vector<13x16xf32>
    %c0_18 = arith.constant 0 : index
    %c0_19 = arith.constant 0 : index
    %34 = vector.load %arg7[%c0_18, %c0_19] : memref<13x16xf32, #tpu.memory_space<vmem>>, vector<13x16xf32>
    tpu.vector_store %arg7[%c0_18, %c0_19], %33 {strides = array<i32>} : memref<13x16xf32, #tpu.memory_space<vmem>>, vector<13x16xf32>,
    return
  }
  func.func @transform_0(%arg0: i32) -> (i32, i32) {
    %c0_i32 = arith.constant 0 : i32
    %c0_i32_0 = arith.constant 0 : i32
    return %c0_i32, %arg0 : i32, i32
  }
  func.func @transform_1(%arg0: i32) -> (i32, i32) {
    %c0_i32 = arith.constant 0 : i32
    %c0_i32_0 = arith.constant 0 : i32
    return %c0_i32, %arg0 : i32, i32
  }
  func.func @transform_2(%arg0: i32) -> (i32, i32) {
    %c0_i32 = arith.constant 0 : i32
    %c0_i32_0 = arith.constant 0 : i32
    %c0_i32_1 = arith.constant 0 : i32
    return %c0_i32, %c0_i32_0 : i32, i32
  }
  func.func @transform_3(%arg0: i32) -> (i32, i32) {
    %c0_i32 = arith.constant 0 : i32
    %c0_i32_0 = arith.constant 0 : i32
    %c0_i32_1 = arith.constant 0 : i32
    return %c0_i32, %c0_i32_0 : i32, i32
  }
  func.func @transform_4(%arg0: i32) -> (i32, i32) {
    %c0_i32 = arith.constant 0 : i32
    %c0_i32_0 = arith.constant 0 : i32
    %c0_i32_1 = arith.constant 0 : i32
    return %c0_i32, %c0_i32_0 : i32, i32
  }
  func.func @transform_5(%arg0: i32) -> (i32, i32) {
    %c0_i32 = arith.constant 0 : i32
    %c0_i32_0 = arith.constant 0 : i32
    return %c0_i32, %arg0 : i32, i32
  }
  func.func @transform_6(%arg0: i32) -> (i32, i32) {
    %c0_i32 = arith.constant 0 : i32
    %c0_i32_0 = arith.constant 0 : i32
    return %c0_i32, %arg0 : i32, i32
  }
}

</mosaic_0001>

<llo_original>
// kernel: tpu_custom_call.1
$region0: #{tpu_custom_call.1}
  #allocation0 [shape = 'u32[]', space=smem, size = 0x4, offset = 0x4, fixed_abs, tag = 'smem constant byte address 0x4 - core index']
  #allocation1 [shape = 'u32[72,128]{1,0:T(1,128)}', space=vmem, size = 0x9000, scoped, tag = 'internal scratch']
  %s0 = inlined_call_operand.vmem [shape: f32[13,16], index: 0, kind: input, shape index: {}]
  %s1 = inlined_call_operand.vmem [shape: f32[13,16], index: 1, kind: input, shape index: {}]
  %s2 = inlined_call_operand.vmem [shape: f32[32,13], index: 2, kind: input, shape index: {}]
  %s3 = inlined_call_operand.vmem [shape: f32[13,32], index: 3, kind: input, shape index: {}]
  %s4 = inlined_call_operand.vmem [shape: f32[32,1], index: 4, kind: input, shape index: {}]
  %s5 = inlined_call_operand.hbm [shape: f32[13,16], index: 5, kind: output, shape index: {0}]
  %s6 = inlined_call_operand.hbm [shape: f32[13,16], index: 6, kind: output, shape index: {1}]
  %7 = xla_tuple %s5, %s6
  %s8 = sld [smem:[#allocation0]]
  $region38: #{tpu_custom_call.1} parent=0
    _
  %s10 = ssub.s32 1, %s8
  %s11 = scalar_select 0, %s10, %s8
  $region1: #{tpu_custom_call.1} parent=0
    #allocation2 [shape = 'u8[8192]{0}', space=vmem, size = 0x2000, scoped, tag = 'output window, operand 0, single buffered']
    #allocation3 [shape = 's32[1]{0}', space=sflag, size = 0x4, scoped, tag = 'scoped memory for tpu_custom_call.1']
    #allocation4 [shape = 'u8[8192]{0}', space=vmem, size = 0x2000, scoped, tag = 'output window, operand 1, single buffered']
    #allocation5 [shape = 's32[1]{0}', space=sflag, size = 0x4, scoped, tag = 'scoped memory for tpu_custom_call.1']
    %12 = vsyncpa [#allocation3], 0
    %13 = vsyncpa [#allocation5], 0
    // Predicated region
    $region2: #{tpu_custom_call.1} parent=1 // pred_check
      _
    $region3: #{tpu_custom_call.1} parent=1 // pred_check_branch
      %15 = sbr.rel (0) target = $region5
    $region4: #{tpu_custom_call.1} parent=1 // pred_region
      _
    $region5: #{tpu_custom_call.1} parent=1 // pred_fallthru
      _
    // Predicated region
    $region6: #{tpu_custom_call.1} parent=1 // pred_check
      _
    $region7: #{tpu_custom_call.1} parent=1 // pred_check_branch
      %17 = sbr.rel (0) target = $region9
    $region8: #{tpu_custom_call.1} parent=1 // pred_region
      _
    $region9: #{tpu_custom_call.1} parent=1 // pred_fallthru
      _
    // Predicated region
    $region10: #{tpu_custom_call.1} parent=1 // pred_check
      _
    $region11: #{tpu_custom_call.1} parent=1 // pred_check_branch
      %19 = sbr.rel (0) target = $region13
    $region12: #{tpu_custom_call.1} parent=1 // pred_region
      _
    $region13: #{tpu_custom_call.1} parent=1 // pred_fallthru
      _
    // Predicated region
    $region14: #{tpu_custom_call.1} parent=1 // pred_check
      _
    $region15: #{tpu_custom_call.1} parent=1 // pred_check_branch
      %21 = sbr.rel (0) target = $region17
    $region16: #{tpu_custom_call.1} parent=1 // pred_region
      _
    $region17: #{tpu_custom_call.1} parent=1 // pred_fallthru
      _
    // Predicated region
    $region18: #{tpu_custom_call.1} parent=1 // pred_check
      _
    $region19: #{tpu_custom_call.1} parent=1 // pred_check_branch
      %23 = sbr.rel (0) target = $region21
    $region20: #{tpu_custom_call.1} parent=1 // pred_region
      _
    $region21: #{tpu_custom_call.1} parent=1 // pred_fallthru
      _
    %v24 = vld [vmem:[%s2] sm:$0xff]
    %v25 = vld [vmem:[%s2 + $0x8] sm:$0xff]
    %v26 = vld [vmem:[%s2 + $0x10] sm:$0xff]
    %v27 = vld [vmem:[%s2 + $0x18] sm:$0xff]
    %v28 = vld [vmem:[%s3] sm:$0xff]
    %v29 = vld [vmem:[%s3 + $0x8] sm:$0x1f]
    %v30 = vld [vmem:[%s4] sm:$0xff]
    %v31 = vld [vmem:[%s4 + $0x8] sm:$0xff]
    %v32 = vld [vmem:[%s4 + $0x10] sm:$0xff]
    %v33 = vld [vmem:[%s4 + $0x18] sm:$0xff]
    %v34 = vld [vmem:[%s0] sm:$0xff]
    %v35 = vld [vmem:[%s0 + $0x8] sm:$0x1f]
    %vm36 = vcmask 105472
    %v38 = vsel %vm36, %v24, 0
    %v41 = vsel %vm36, %v25, 0
    %v44 = vsel %vm36, %v26, 0
    %v47 = vsel %vm36, %v27, 0
    %vm49 = vcmask 1044480
    %v51 = vsel %vm49, %v35, 0
    %53 = vmatpush.msra.mxu0 0.0
    %54 = vmatpush.msra.mxu0 0.0
    %55 = vmatpush.msra.mxu0 0.0
    %56 = vmatpush.msra.mxu0 0.0
    %57 = vmatpush.msra.mxu0 0.0
    %58 = vmatpush.msra.mxu0 0.0
    %59 = vmatpush.msra.mxu0 0.0
    %60 = vmatpush.msra.mxu0 0.0
    %61 = vmatpush.msra.mxu0 0.0
    %62 = vmatpush.msra.mxu0 0.0
    %63 = vmatpush.msra.mxu0 0.0
    %64 = vmatpush.msra.mxu0 0.0
    %65 = vmatpush.msra.mxu0 0.0
    %66 = vmatpush.msra.mxu0 0.0
    %67 = vmatpush.msra.mxu0 %v51
    %68 = vmatpush.msra.mxu0 %v34
    %69 = vmatmul.f32.gmra.mxu0 %v38
    %v70 = vpop.f32.mrf.mxu0
    %v71 = vadd.f32 0.0, %v70
    %72 = vmatmul.f32.gmra.mxu0 %v41
    %v73 = vpop.f32.mrf.mxu0
    %v74 = vadd.f32 0.0, %v73
    %75 = vmatmul.f32.gmra.mxu0 %v44
    %v76 = vpop.f32.mrf.mxu0
    %v77 = vadd.f32 0.0, %v76
    %78 = vmatmul.f32.gmra.mxu0 %v47
    %v79 = vpop.f32.mrf.mxu0
    %v80 = vadd.f32 0.0, %v79
    %81 = vdwg.mxu0
    %83 = vset.pattern.permute.xlu0 0
    %84 = vperm.xlu0 %83, %v30
    %v85 = vpop.permute.xlu0 %84
    %88 = vset.pattern.permute.xlu0 0
    %89 = vperm.xlu0 %88, %v31
    %v90 = vpop.permute.xlu0 %89
    %93 = vset.pattern.permute.xlu0 0
    %94 = vperm.xlu0 %93, %v32
    %v95 = vpop.permute.xlu0 %94
    %98 = vset.pattern.permute.xlu0 0
    %99 = vperm.xlu0 %98, %v33
    %v100 = vpop.permute.xlu0 %99
    %v102 = vmax.f32 %v71, %v85
    %v103 = vmax.f32 %v74, %v90
    %v104 = vmax.f32 %v77, %v95
    %v105 = vmax.f32 %v80, %v100
    %v106 = vsub.f32 %v71, %v85
    %v107 = vsub.f32 %v74, %v90
    %v108 = vsub.f32 %v77, %v95
    %v109 = vsub.f32 %v80, %v100
    %v110 = vand.u32 2147483647, %v106
    %v111 = vand.u32 2147483647, %v107
    %v112 = vand.u32 2147483647, %v108
    %v113 = vand.u32 2147483647, %v109
    %v114 = vsub.f32 0.0, %v110
    %v115 = vsub.f32 0.0, %v111
    %v116 = vsub.f32 0.0, %v112
    %v117 = vsub.f32 0.0, %v113
    %v118 = vmul.f32 %v114, 1.442695
    %v119 = vpow.pop %v118
    %v120 = vmul.f32 %v115, 1.442695
    %v121 = vpow.pop %v120
    %v122 = vmul.f32 %v116, 1.442695
    %v123 = vpow.pop %v122
    %v124 = vmul.f32 %v117, 1.442695
    %v125 = vpow.pop %v124
    %v126 = vadd.f32 %v119, 1.0
    %v127 = vadd.f32 %v121, 1.0
    %v128 = vadd.f32 %v123, 1.0
    %v129 = vadd.f32 %v125, 1.0
    %v130 = vlog2.pop %v126
    %v131 = vmul.f32 %v130, 0.6931472
    %v132 = vlog2.pop %v127
    %v133 = vmul.f32 %v132, 0.6931472
    %v134 = vlog2.pop %v128
    %v135 = vmul.f32 %v134, 0.6931472
    %v136 = vlog2.pop %v129
    %v137 = vmul.f32 %v136, 0.6931472
    %v138 = vadd.f32 %v102, %v131
    %v139 = vadd.f32 %v103, %v133
    %v140 = vadd.f32 %v104, %v135
    %v141 = vadd.f32 %v105, %v137
    %vm142 = vcmask 261120
    %v144 = vsel %vm142, %v28, 0
    %v147 = vsel %vm142, %v29, 0
    %149 = vmatpush.msra.mxu0 0.0
    %150 = vmatpush.msra.mxu0 0.0
    %151 = vmatpush.msra.mxu0 0.0
    %152 = vmatpush.msra.mxu0 0.0
    %153 = vmatpush.msra.mxu0 0.0
    %154 = vmatpush.msra.mxu0 0.0
    %155 = vmatpush.msra.mxu0 0.0
    %156 = vmatpush.msra.mxu0 0.0
    %157 = vmatpush.msra.mxu0 0.0
    %158 = vmatpush.msra.mxu0 0.0
    %159 = vmatpush.msra.mxu0 0.0
    %160 = vmatpush.msra.mxu0 0.0
    %161 = vmatpush.msra.mxu0 %v141
    %162 = vmatpush.msra.mxu0 %v140
    %163 = vmatpush.msra.mxu0 %v139
    %164 = vmatpush.msra.mxu0 %v138
    %165 = vmatmul.f32.gmra.mxu0 %v144
    %v166 = vpop.f32.mrf.mxu0
    %v167 = vadd.f32 0.0, %v166
    %168 = vmatmul.f32.gmra.mxu0 %v147
    %v169 = vpop.f32.mrf.mxu0
    %v170 = vadd.f32 0.0, %v169
    %171 = vdwg.mxu0
    %vm172 = vcmask 130048
    %173 = vst.msk [vmem:[#allocation2] sm:$0xff] %vm172, %v167
    %vm174 = vcmask 126976
    %175 = vst.msk [vmem:[#allocation2 + $0x8] sm:$0x1f] %vm174, %v170
    %v176 = vld [vmem:[%s1] sm:$0xff]
    %v177 = vld [vmem:[%s1 + $0x8] sm:$0x1f]
    %v179 = vsel %vm49, %v177, 0
    %181 = vmatpush.msra.mxu0 0.0
    %182 = vmatpush.msra.mxu0 0.0
    %183 = vmatpush.msra.mxu0 0.0
    %184 = vmatpush.msra.mxu0 0.0
    %185 = vmatpush.msra.mxu0 0.0
    %186 = vmatpush.msra.mxu0 0.0
    %187 = vmatpush.msra.mxu0 0.0
    %188 = vmatpush.msra.mxu0 0.0
    %189 = vmatpush.msra.mxu0 0.0
    %190 = vmatpush.msra.mxu0 0.0
    %191 = vmatpush.msra.mxu0 0.0
    %192 = vmatpush.msra.mxu0 0.0
    %193 = vmatpush.msra.mxu0 0.0
    %194 = vmatpush.msra.mxu0 0.0
    %195 = vmatpush.msra.mxu0 %v179
    %196 = vmatpush.msra.mxu0 %v176
    %197 = vmatmul.f32.gmra.mxu0 %v38
    %v198 = vpop.f32.mrf.mxu0
    %v199 = vadd.f32 0.0, %v198
    %200 = vmatmul.f32.gmra.mxu0 %v41
    %v201 = vpop.f32.mrf.mxu0
    %v202 = vadd.f32 0.0, %v201
    %203 = vmatmul.f32.gmra.mxu0 %v44
    %v204 = vpop.f32.mrf.mxu0
    %v205 = vadd.f32 0.0, %v204
    %206 = vmatmul.f32.gmra.mxu0 %v47
    %v207 = vpop.f32.mrf.mxu0
    %v208 = vadd.f32 0.0, %v207
    %209 = vdwg.mxu0
    %v210 = vmax.f32 %v199, %v85
    %v211 = vmax.f32 %v202, %v90
    %v212 = vmax.f32 %v205, %v95
    %v213 = vmax.f32 %v208, %v100
    %v214 = vsub.f32 %v199, %v85
    %v215 = vsub.f32 %v202, %v90
    %v216 = vsub.f32 %v205, %v95
    %v217 = vsub.f32 %v208, %v100
    %v218 = vand.u32 2147483647, %v214
    %v219 = vand.u32 2147483647, %v215
    %v220 = vand.u32 2147483647, %v216
    %v221 = vand.u32 2147483647, %v217
    %v222 = vsub.f32 0.0, %v218
    %v223 = vsub.f32 0.0, %v219
    %v224 = vsub.f32 0.0, %v220
    %v225 = vsub.f32 0.0, %v221
    %v226 = vmul.f32 %v222, 1.442695
    %v227 = vpow.pop %v226
    %v228 = vmul.f32 %v223, 1.442695
    %v229 = vpow.pop %v228
    %v230 = vmul.f32 %v224, 1.442695
    %v231 = vpow.pop %v230
    %v232 = vmul.f32 %v225, 1.442695
    %v233 = vpow.pop %v232
    %v234 = vadd.f32 %v227, 1.0
    %v235 = vadd.f32 %v229, 1.0
    %v236 = vadd.f32 %v231, 1.0
    %v237 = vadd.f32 %v233, 1.0
    %v238 = vlog2.pop %v234
    %v239 = vmul.f32 %v238, 0.6931472
    %v240 = vlog2.pop %v235
    %v241 = vmul.f32 %v240, 0.6931472
    %v242 = vlog2.pop %v236
    %v243 = vmul.f32 %v242, 0.6931472
    %v244 = vlog2.pop %v237
    %v245 = vmul.f32 %v244, 0.6931472
    %v246 = vadd.f32 %v210, %v239
    %v247 = vadd.f32 %v211, %v241
    %v248 = vadd.f32 %v212, %v243
    %v249 = vadd.f32 %v213, %v245
    %250 = vmatpush.msra.mxu0 0.0
    %251 = vmatpush.msra.mxu0 0.0
    %252 = vmatpush.msra.mxu0 0.0
    %253 = vmatpush.msra.mxu0 0.0
    %254 = vmatpush.msra.mxu0 0.0
    %255 = vmatpush.msra.mxu0 0.0
    %256 = vmatpush.msra.mxu0 0.0
    %257 = vmatpush.msra.mxu0 0.0
    %258 = vmatpush.msra.mxu0 0.0
    %259 = vmatpush.msra.mxu0 0.0
    %260 = vmatpush.msra.mxu0 0.0
    %261 = vmatpush.msra.mxu0 0.0
    %262 = vmatpush.msra.mxu0 %v249
    %263 = vmatpush.msra.mxu0 %v248
    %264 = vmatpush.msra.mxu0 %v247
    %265 = vmatpush.msra.mxu0 %v246
    %266 = vmatmul.f32.gmra.mxu0 %v144
    %v267 = vpop.f32.mrf.mxu0
    %v268 = vadd.f32 0.0, %v267
    %269 = vmatmul.f32.gmra.mxu0 %v147
    %v270 = vpop.f32.mrf.mxu0
    %v271 = vadd.f32 0.0, %v270
    %272 = vdwg.mxu0
    %273 = vst.msk [vmem:[#allocation4] sm:$0xff] %vm172, %v268
    %274 = vst.msk [vmem:[#allocation4 + $0x8] sm:$0x1f] %vm174, %v271
    // Predicated region
    $region22: #{tpu_custom_call.1} parent=1 // pred_check
      _
    $region23: #{tpu_custom_call.1} parent=1 // pred_check_branch
      %276 = sbr.rel (0) target = $region25
    $region24: #{tpu_custom_call.1} parent=1 // pred_region
      %278 = vsyncadd [#allocation3], 0
      %s279 = sshll.u32 [#allocation2], 4
      %s280 = int_to_ptr.vmem [resolvable:$true] %s279
      %s281 = sshll.u32 %s5, 4
      %s282 = int_to_ptr.hbm [resolvable:$true] %s281
      %287 = dma.vmem_to_hbm [thread:$0]  %s280, 256, %s282, [#allocation3], 128, 128, 8
    $region25: #{tpu_custom_call.1} parent=1 // pred_fallthru
      _
    // Predicated region
    $region26: #{tpu_custom_call.1} parent=1 // pred_check
      _
    $region27: #{tpu_custom_call.1} parent=1 // pred_check_branch
      %289 = sbr.rel (0) target = $region29
    $region28: #{tpu_custom_call.1} parent=1 // pred_region
      %291 = vsyncadd [#allocation5], 0
      %s292 = sshll.u32 [#allocation4], 4
      %s293 = int_to_ptr.vmem [resolvable:$true] %s292
      %s294 = sshll.u32 %s6, 4
      %s295 = int_to_ptr.hbm [resolvable:$true] %s294
      %300 = dma.vmem_to_hbm [thread:$0]  %s293, 256, %s295, [#allocation5], 128, 128, 8
    $region29: #{tpu_custom_call.1} parent=1 // pred_fallthru
      _
    // Predicated region
    $region30: #{tpu_custom_call.1} parent=1 // pred_check
      _
    $region31: #{tpu_custom_call.1} parent=1 // pred_check_branch
      %302 = sbr.rel (0) target = $region33
    $region32: #{tpu_custom_call.1} parent=1 // pred_region
      %304 = dma.done [#allocation3], 256
    $region33: #{tpu_custom_call.1} parent=1 // pred_fallthru
      _
    // Predicated region
    $region34: #{tpu_custom_call.1} parent=1 // pred_check
      _
    $region35: #{tpu_custom_call.1} parent=1 // pred_check_branch
      %306 = sbr.rel (0) target = $region37
    $region36: #{tpu_custom_call.1} parent=1 // pred_region
      %308 = dma.done [#allocation5], 256
    $region37: #{tpu_custom_call.1} parent=1 // pred_fallthru
      _
    %309 = vsyncpa [#allocation3], 1
    %310 = vsyncpa [#allocation5], 1

</llo_original>
